<compile_context>
chip_gen: v6e
topology: v6e:2x2x1
jax: 0.10.0
libtpu: 0.0.40
codegen_flags: <defaults>
</compile_context>

<pallas_src>
import jax
import jax.numpy as jnp
from jax.experimental import pallas as pl
from jax.experimental.pallas import tpu as pltpu


def _cat_kernel(*refs):
    """refs = (in_ref_0, ..., in_ref_{n-1}, out_ref).

    Build the concatenated row tile once and store it with a single
    lane-dense write (one wide vst per tile instead of N masked ones).
    """
    *in_refs, out_ref = refs
    out_ref[...] = jnp.concatenate([r[...] for r in in_refs], axis=1)


def _sublane_multiple(dtype) -> int:
    """Second-minor tiling multiple for this dtype (8 f32, 16 bf16, 32 i8)."""
    itemsize = jnp.dtype(dtype).itemsize
    return max(8, 32 // max(itemsize, 1))


def _pick_batch_tile(batch: int, total_features: int, dtype) -> int:
    """Pick a batch tile: sublane-aligned, a few hundred rows, VMEM-safe."""
    itemsize = jnp.dtype(dtype).itemsize
    sub = _sublane_multiple(dtype)
    if batch <= sub:
        return batch  # full-dim block is always a legal block shape

    # Double-buffered inputs (sum F_i == total_features) + double-buffered
    # output => ~4 * TB * total_features * itemsize bytes resident.
    vmem_budget = 24 * 1024 * 1024  # headroom under 32 MiB scoped default
    per_row_bytes = 4 * total_features * itemsize
    tb_cap = max(sub, vmem_budget // max(per_row_bytes, 1))

    tb = min(batch, 512, tb_cap)
    tb = max(sub, (tb // sub) * sub)
    if tb >= batch:
        return batch
    return tb


def cat_interaction(dense_feature: jax.Array,
                    sparse_features,
                    *,
                    batch_tile: int | None = None,
                    force_pallas: bool = False):
    """Concatenate [dense_feature] + sparse_features along axis=1."""
    inputs = [dense_feature] + list(sparse_features)
    batch = dense_feature.shape[0]
    dtype = dense_feature.dtype
    total_features = sum(x.shape[1] for x in inputs)

    for x in inputs:
        assert x.ndim == 2 and x.shape[0] == batch, "all inputs must be [B, F_i]"
        assert x.dtype == dtype, "all inputs must share a dtype"

    total_bytes = batch * total_features * jnp.dtype(dtype).itemsize
    if not force_pallas and total_bytes < (1 << 20):
        # Tiny problem: XLA's fused concatenate beats a standalone kernel.
        return jnp.concatenate(inputs, axis=1)

    tb = batch_tile if batch_tile is not None else _pick_batch_tile(
        batch, total_features, dtype)
    grid = (pl.cdiv(batch, tb),)

    in_specs = [
        pl.BlockSpec((tb, x.shape[1]), lambda i: (i, 0)) for x in inputs
    ]
    out_spec = pl.BlockSpec((tb, total_features), lambda i: (i, 0))
    out_shape = jax.ShapeDtypeStruct((batch, total_features), dtype)

    return pl.pallas_call(
        _cat_kernel,
        out_shape=out_shape,
        grid=grid,
        in_specs=in_specs,
        out_specs=out_spec,
        compiler_params=pltpu.CompilerParams(
            dimension_semantics=("parallel",)),
    )(*inputs)


if __name__ == "__main__":
    key = jax.random.PRNGKey(0)
    k_dense, k_s0, k_s1, k_s2 = jax.random.split(key, 4)

    batch = 32
    dense_dim = 32
    sparse_dims = [16, 16, 8]

    dense_feature = jax.random.normal(k_dense, (batch, dense_dim), dtype=jnp.float32)
    sparse_features = [
        jax.random.normal(k, (batch, d), dtype=jnp.float32)
        for k, d in zip([k_s0, k_s1, k_s2], sparse_dims)
    ]

    # Force the Pallas path (shapes are tiny) and use a 16-row batch tile so
    # the grid has 2 steps and the tiled/pipelined path is actually exercised.
    out = cat_interaction(dense_feature, sparse_features,
                          batch_tile=16, force_pallas=True)
    out = jax.block_until_ready(out)

    ref = jnp.concatenate([dense_feature] + sparse_features, axis=1)
    assert out.shape == (batch, dense_dim + sum(sparse_dims))
    assert out.dtype == dense_feature.dtype
    assert jnp.array_equal(out, ref), "Pallas cat mismatch vs jnp.concatenate"

    print("KERNEL_OK")
</pallas_src>

<mosaic_0001>
module attributes {stable_mosaic.version = 11 : i64} {
  func.func @_cat_kernel(%arg0: i32, %arg1: memref<16x32xf32, #tpu.memory_space<vmem>>, %arg2: memref<16x16xf32, #tpu.memory_space<vmem>>, %arg3: memref<16x16xf32, #tpu.memory_space<vmem>>, %arg4: memref<16x8xf32, #tpu.memory_space<vmem>>, %arg5: memref<16x72xf32, #tpu.memory_space<vmem>>) attributes {dimension_semantics = [#tpu.dimension_semantics<parallel>], iteration_bounds = array<i64: 2>, scalar_prefetch = 0 : i64, scratch_operands = 0 : i64, tpu.core_type = #tpu.core_type<tc>, window_params = [{transform_indices = @transform_0, window_bounds = array<i64: 16, 32>}, {transform_indices = @transform_1, window_bounds = array<i64: 16, 16>}, {transform_indices = @transform_2, window_bounds = array<i64: 16, 16>}, {transform_indices = @transform_3, window_bounds = array<i64: 16, 8>}, {transform_indices = @transform_4, window_bounds = array<i64: 16, 72>}]} {
    %c0 = arith.constant 0 : index
    %c0_0 = arith.constant 0 : index
    %0 = vector.load %arg1[%c0, %c0_0] : memref<16x32xf32, #tpu.memory_space<vmem>>, vector<16x32xf32>
    %c0_1 = arith.constant 0 : index
    %c0_2 = arith.constant 0 : index
    %1 = vector.load %arg2[%c0_1, %c0_2] : memref<16x16xf32, #tpu.memory_space<vmem>>, vector<16x16xf32>
    %c0_3 = arith.constant 0 : index
    %c0_4 = arith.constant 0 : index
    %2 = vector.load %arg3[%c0_3, %c0_4] : memref<16x16xf32, #tpu.memory_space<vmem>>, vector<16x16xf32>
    %c0_5 = arith.constant 0 : index
    %c0_6 = arith.constant 0 : index
    %3 = vector.load %arg4[%c0_5, %c0_6] : memref<16x8xf32, #tpu.memory_space<vmem>>, vector<16x8xf32>
    %4 = tpu.concatenate %0, %1, %2, %3 in 1 : vector<16x32xf32>, vector<16x16xf32>, vector<16x16xf32>, vector<16x8xf32> -> vector<16x72xf32>
    %c0_7 = arith.constant 0 : index
    %c0_8 = arith.constant 0 : index
    %5 = vector.load %arg5[%c0_7, %c0_8] : memref<16x72xf32, #tpu.memory_space<vmem>>, vector<16x72xf32>
    tpu.vector_store %arg5[%c0_7, %c0_8], %4 {strides = array<i32>} : memref<16x72xf32, #tpu.memory_space<vmem>>, vector<16x72xf32>,
    return
  }
  func.func @transform_0(%arg0: i32) -> (i32, i32) {
    %c0_i32 = arith.constant 0 : i32
    %c0_i32_0 = arith.constant 0 : i32
    return %arg0, %c0_i32 : i32, i32
  }
  func.func @transform_1(%arg0: i32) -> (i32, i32) {
    %c0_i32 = arith.constant 0 : i32
    %c0_i32_0 = arith.constant 0 : i32
    return %arg0, %c0_i32 : i32, i32
  }
  func.func @transform_2(%arg0: i32) -> (i32, i32) {
    %c0_i32 = arith.constant 0 : i32
    %c0_i32_0 = arith.constant 0 : i32
    return %arg0, %c0_i32 : i32, i32
  }
  func.func @transform_3(%arg0: i32) -> (i32, i32) {
    %c0_i32 = arith.constant 0 : i32
    %c0_i32_0 = arith.constant 0 : i32
    return %arg0, %c0_i32 : i32, i32
  }
  func.func @transform_4(%arg0: i32) -> (i32, i32) {
    %c0_i32 = arith.constant 0 : i32
    %c0_i32_0 = arith.constant 0 : i32
    return %arg0, %c0_i32 : i32, i32
  }
}

</mosaic_0001>

<llo_original>
// kernel: tpu_custom_call.1
$region0: #{tpu_custom_call.1}
  #allocation0 [shape = 'u32[]', space=smem, size = 0x4, offset = 0x4, fixed_abs, tag = 'smem constant byte address 0x4 - core index']
  #allocation1 [shape = 'u32[144,128]{1,0:T(1,128)}', space=vmem, size = 0x12000, scoped, tag = 'internal scratch']
  %s0 = inlined_call_operand.vmem [shape: f32[32,32], index: 0, kind: input, shape index: {}]
  %s1 = inlined_call_operand.vmem [shape: f32[32,16], index: 1, kind: input, shape index: {}]
  %s2 = inlined_call_operand.vmem [shape: f32[32,16], index: 2, kind: input, shape index: {}]
  %s3 = inlined_call_operand.vmem [shape: f32[32,8], index: 3, kind: input, shape index: {}]
  %s4 = inlined_call_operand.hbm [shape: f32[32,72], index: 4, kind: output, shape index: {}]
  %s5 = sld [smem:[#allocation0]]
  $region49: #{tpu_custom_call.1} parent=0
    _
  %s7 = ssub.s32 1, %s5
  %s8 = scalar_select 0, %s7, %s5
  $region1: #{tpu_custom_call.1} parent=0
    #allocation2 [shape = 'u8[16384]{0}', space=vmem, size = 0x4000, scoped, tag = 'output window, operand 0']
    #allocation3 [shape = 's32[2]{0}', space=sflag, size = 0x8, scoped, tag = 'scoped memory for tpu_custom_call.1']
    %9 = vsyncpa [#allocation3], 0
    %s10 = scalar_lea.sflag [#allocation3], 1
    %11 = vsyncpa %s10, 0
    loop: start=0, step=1, limit=4
    $region2: #{tpu_custom_call.1} parent=1 // loop_pre_header
      _
    $region3: #{tpu_custom_call.1} parent=1 // loop_header
      %s13 = sphi 0, %s17
      %p14 = scmp.ge.s32.totalorder %s13, 4
      %s23 = sphi 0, %s25
      %s26 = sphi 0, %s23
      %s27 = sphi 0, %s26
      %s43 = sphi 0, %s27
      %s49 = sphi 0, %s51
      %s52 = sphi 0, %s49
      %s53 = sphi 0, %s52
      %s69 = sphi 0, %s53
      %s75 = sphi 0, %s77
      %s78 = sphi 0, %s75
      %s79 = sphi 0, %s78
      %s95 = sphi 0, %s79
      %s101 = sphi 0, %s103
      %s104 = sphi 0, %s101
      %s105 = sphi 0, %s104
      %s121 = sphi 0, %s105
      %s127 = sphi 0, %s129
      %s130 = sphi 0, %s127
      %s131 = sphi 0, %s130
      %s147 = sphi 0, %s131
    $region4: #{tpu_custom_call.1} parent=1 // loop_header_branch
      %16 = sbr.rel (%p14) target = $region8
    $region5: #{tpu_custom_call.1} parent=1 // loop_body
      %s18 = ssub.s32 %s13, 1
      %s19 = ssub.s32 %s13, 2
      %s20 = sadd.s32 %s13, 1
      %s21 = ssub.s32 %s13, %s20
      %p22 = scmp.eq.s32.totalorder %s21, 0
      %s24 = sadd.s32 %s23, 1
      %s25 = scalar_select %p22, %s23, %s24
      %p28 = pneg %p22
      %p29 = scmp.eq.s32.totalorder %s13, 1
      %p30 = por %p28, %p29
      %p31 = scmp.ne.s32.totalorder %s23, %s26
      %p32 = scmp.eq.s32.totalorder %s13, 0
      %p33 = por %p31, %p32
      %p34 = scmp.ne.s32.totalorder %s23, %s26
      %p35 = scmp.eq.s32.totalorder %s18, 1
      %p36 = por %p34, %p35
      %p37 = scmp.ne.s32.totalorder %s26, %s27
      %p38 = scmp.eq.s32.totalorder %s18, 0
      %p39 = por %p37, %p38
      %p40 = scmp.ne.s32.totalorder %s26, %s27
      %p41 = scmp.eq.s32.totalorder %s19, 1
      %p42 = por %p40, %p41
      %p44 = scmp.ne.s32.totalorder %s27, %s43
      %p45 = scmp.eq.s32.totalorder %s19, 0
      %p46 = por %p44, %p45
      %s47 = ssub.s32 %s13, %s20
      %p48 = scmp.eq.s32.totalorder %s47, 0
      %s50 = sadd.s32 %s49, 1
      %s51 = scalar_select %p48, %s49, %s50
      %p54 = pneg %p48
      %p55 = scmp.eq.s32.totalorder %s13, 1
      %p56 = por %p54, %p55
      %p57 = scmp.ne.s32.totalorder %s49, %s52
      %p58 = scmp.eq.s32.totalorder %s13, 0
      %p59 = por %p57, %p58
      %p60 = scmp.ne.s32.totalorder %s49, %s52
      %p61 = scmp.eq.s32.totalorder %s18, 1
      %p62 = por %p60, %p61
      %p63 = scmp.ne.s32.totalorder %s52, %s53
      %p64 = scmp.eq.s32.totalorder %s18, 0
      %p65 = por %p63, %p64
      %p66 = scmp.ne.s32.totalorder %s52, %s53
      %p67 = scmp.eq.s32.totalorder %s19, 1
      %p68 = por %p66, %p67
      %p70 = scmp.ne.s32.totalorder %s53, %s69
      %p71 = scmp.eq.s32.totalorder %s19, 0
      %p72 = por %p70, %p71
      %s73 = ssub.s32 %s13, %s20
      %p74 = scmp.eq.s32.totalorder %s73, 0
      %s76 = sadd.s32 %s75, 1
      %s77 = scalar_select %p74, %s75, %s76
      %p80 = pneg %p74
      %p81 = scmp.eq.s32.totalorder %s13, 1
      %p82 = por %p80, %p81
      %p83 = scmp.ne.s32.totalorder %s75, %s78
      %p84 = scmp.eq.s32.totalorder %s13, 0
      %p85 = por %p83, %p84
      %p86 = scmp.ne.s32.totalorder %s75, %s78
      %p87 = scmp.eq.s32.totalorder %s18, 1
      %p88 = por %p86, %p87
      %p89 = scmp.ne.s32.totalorder %s78, %s79
      %p90 = scmp.eq.s32.totalorder %s18, 0
      %p91 = por %p89, %p90
      %p92 = scmp.ne.s32.totalorder %s78, %s79
      %p93 = scmp.eq.s32.totalorder %s19, 1
      %p94 = por %p92, %p93
      %p96 = scmp.ne.s32.totalorder %s79, %s95
      %p97 = scmp.eq.s32.totalorder %s19, 0
      %p98 = por %p96, %p97
      %s99 = ssub.s32 %s13, %s20
      %p100 = scmp.eq.s32.totalorder %s99, 0
      %s102 = sadd.s32 %s101, 1
      %s103 = scalar_select %p100, %s101, %s102
      %p106 = pneg %p100
      %p107 = scmp.eq.s32.totalorder %s13, 1
      %p108 = por %p106, %p107
      %p109 = scmp.ne.s32.totalorder %s101, %s104
      %p110 = scmp.eq.s32.totalorder %s13, 0
      %p111 = por %p109, %p110
      %p112 = scmp.ne.s32.totalorder %s101, %s104
      %p113 = scmp.eq.s32.totalorder %s18, 1
      %p114 = por %p112, %p113
      %p115 = scmp.ne.s32.totalorder %s104, %s105
      %p116 = scmp.eq.s32.totalorder %s18, 0
      %p117 = por %p115, %p116
      %p118 = scmp.ne.s32.totalorder %s104, %s105
      %p119 = scmp.eq.s32.totalorder %s19, 1
      %p120 = por %p118, %p119
      %p122 = scmp.ne.s32.totalorder %s105, %s121
      %p123 = scmp.eq.s32.totalorder %s19, 0
      %p124 = por %p122, %p123
      %s125 = ssub.s32 %s13, %s20
      %p126 = scmp.eq.s32.totalorder %s125, 0
      %s128 = sadd.s32 %s127, 1
      %s129 = scalar_select %p126, %s127, %s128
      %p132 = pneg %p126
      %p133 = scmp.eq.s32.totalorder %s13, 1
      %p134 = por %p132, %p133
      %p135 = scmp.ne.s32.totalorder %s127, %s130
      %p136 = scmp.eq.s32.totalorder %s13, 0
      %p137 = por %p135, %p136
      %p138 = scmp.ne.s32.totalorder %s127, %s130
      %p139 = scmp.eq.s32.totalorder %s18, 1
      %p140 = por %p138, %p139
      %p141 = scmp.ne.s32.totalorder %s130, %s131
      %p142 = scmp.eq.s32.totalorder %s18, 0
      %p143 = por %p141, %p142
      %p144 = scmp.ne.s32.totalorder %s130, %s131
      %p145 = scmp.eq.s32.totalorder %s19, 1
      %p146 = por %p144, %p145
      %p148 = scmp.ne.s32.totalorder %s131, %s147
      %p149 = scmp.eq.s32.totalorder %s19, 0
      %p150 = por %p148, %p149
      %p151 = scmp.le.s32.totalorder 1, %s13
      %p152 = scmp.lt.s32.totalorder %s13, 3
      %p153 = pnand %p151, %p152
      %p154 = pneg %p153
      // Predicated region
      $region9: #{tpu_custom_call.1} parent=5 // pred_check
        _
      $region10: #{tpu_custom_call.1} parent=5 // pred_check_branch
        %156 = sbr.rel (%p153) target = $region12
      $region11: #{tpu_custom_call.1} parent=5 // pred_region
        %s157 = ssub.s32 %s13, 1
      $region12: #{tpu_custom_call.1} parent=5 // pred_fallthru
        _
      %p158 = scmp.lt.s32.totalorder %s13, 2
      // Predicated region
      $region13: #{tpu_custom_call.1} parent=5 // pred_check
        %p159 = pneg %p158
      $region14: #{tpu_custom_call.1} parent=5 // pred_check_branch
        %161 = sbr.rel (%p159) target = $region16
      $region15: #{tpu_custom_call.1} parent=5 // pred_region
        // Predicated region
        $region17: #{tpu_custom_call.1} parent=15 // pred_check
          %p162 = pneg %p33
        $region18: #{tpu_custom_call.1} parent=15 // pred_check_branch
          %164 = sbr.rel (%p162) target = $region20
        $region19: #{tpu_custom_call.1} parent=15 // pred_region
          %s165 = smul.u32 2, %s13
          %p166 = scmp.lt.s32.totalorder %s165, 3
          %s167 = scalar_select %p166, %s165, 3
          %s168 = smul.addr %s167, 8
          %s169 = scalar_lea.vmem %s0, %s168
          %s170 = smul.u32 2, %s13
        $region20: #{tpu_custom_call.1} parent=15 // pred_fallthru
          _
        // Predicated region
        $region21: #{tpu_custom_call.1} parent=15 // pred_check
          %p171 = pneg %p59
        $region22: #{tpu_custom_call.1} parent=15 // pred_check_branch
          %173 = sbr.rel (%p171) target = $region24
        $region23: #{tpu_custom_call.1} parent=15 // pred_region
          %s174 = smul.u32 2, %s13
          %p175 = scmp.lt.s32.totalorder %s174, 3
          %s176 = scalar_select %p175, %s174, 3
          %s177 = smul.addr %s176, 8
          %s178 = scalar_lea.vmem %s1, %s177
          %s179 = smul.u32 2, %s13
        $region24: #{tpu_custom_call.1} parent=15 // pred_fallthru
          _
        // Predicated region
        $region25: #{tpu_custom_call.1} parent=15 // pred_check
          %p180 = pneg %p85
        $region26: #{tpu_custom_call.1} parent=15 // pred_check_branch
          %182 = sbr.rel (%p180) target = $region28
        $region27: #{tpu_custom_call.1} parent=15 // pred_region
          %s183 = smul.u32 2, %s13
          %p184 = scmp.lt.s32.totalorder %s183, 3
          %s185 = scalar_select %p184, %s183, 3
          %s186 = smul.addr %s185, 8
          %s187 = scalar_lea.vmem %s2, %s186
          %s188 = smul.u32 2, %s13
        $region28: #{tpu_custom_call.1} parent=15 // pred_fallthru
          _
        // Predicated region
        $region29: #{tpu_custom_call.1} parent=15 // pred_check
          %p189 = pneg %p111
        $region30: #{tpu_custom_call.1} parent=15 // pred_check_branch
          %191 = sbr.rel (%p189) target = $region32
        $region31: #{tpu_custom_call.1} parent=15 // pred_region
          %s192 = smul.u32 2, %s13
          %p193 = scmp.lt.s32.totalorder %s192, 3
          %s194 = scalar_select %p193, %s192, 3
          %s195 = smul.addr %s194, 8
          %s196 = scalar_lea.vmem %s3, %s195
          %s197 = smul.u32 2, %s13
        $region32: #{tpu_custom_call.1} parent=15 // pred_fallthru
          _
      $region16: #{tpu_custom_call.1} parent=5 // pred_fallthru
        _
      %p198 = scmp.le.s32.totalorder 1, %s13
      %p199 = scmp.lt.s32.totalorder %s13, 3
      %p200 = pnand %p198, %p199
      %p201 = pneg %p200
      // Predicated region
      $region33: #{tpu_custom_call.1} parent=5 // pred_check
        _
      $region34: #{tpu_custom_call.1} parent=5 // pred_check_branch
        %203 = sbr.rel (%p200) target = $region36
      $region35: #{tpu_custom_call.1} parent=5 // pred_region
        %s204 = ssub.s32 %s13, 1
        %s205 = smul.u32 2, %s18
        %p206 = scmp.lt.s32.totalorder %s205, 3
        %s207 = scalar_select %p206, %s205, 3
        %s208 = smul.addr %s207, 8
        %s209 = scalar_lea.vmem %s0, %s208
        %p210 = pneg %p39
        %p211 = pneg %p36
        %s212 = smul.u32 2, %s18
        %p213 = scmp.lt.s32.totalorder %s212, 3
        %s214 = scalar_select %p213, %s212, 3
        %s215 = smul.addr %s214, 8
        %s216 = scalar_lea.vmem %s1, %s215
        %p217 = pneg %p65
        %p218 = pneg %p62
        %s219 = smul.u32 2, %s18
        %p220 = scmp.lt.s32.totalorder %s219, 3
        %s221 = scalar_select %p220, %s219, 3
        %s222 = smul.addr %s221, 8
        %s223 = scalar_lea.vmem %s2, %s222
        %p224 = pneg %p91
        %p225 = pneg %p88
        %s226 = smul.u32 2, %s18
        %p227 = scmp.lt.s32.totalorder %s226, 3
        %s228 = scalar_select %p227, %s226, 3
        %s229 = smul.addr %s228, 8
        %s230 = scalar_lea.vmem %s3, %s229
        %p231 = pneg %p117
        %p232 = pneg %p114
        %p233 = pneg %p143
        %p234 = pneg %p140
        %s235 = sand.u32 %s130, 1
        %s236 = scalar_lea.sflag [#allocation3], %s235
        %s237 = sand.u32 %s130, 1
        %s238 = smul.addr %s237, 16
        %s239 = scalar_lea.vmem [#allocation2], %s238
        %s240 = smul.u32 2, %s18
        %p241 = scmp.lt.s32.totalorder %s240, 3
        %s242 = scalar_select %p241, %s240, 3
        %s243 = smul.addr %s242, 8
        %s244 = scalar_lea.vmem %s0, %s243
        %s245 = smul.u32 2, %s18
        %s246 = smul.u32 2, %s18
        %p247 = scmp.lt.s32.totalorder %s246, 3
        %s248 = scalar_select %p247, %s246, 3
        %s249 = smul.addr %s248, 8
        %s250 = scalar_lea.vmem %s1, %s249
        %s251 = smul.u32 2, %s18
        %s252 = smul.u32 2, %s18
        %p253 = scmp.lt.s32.totalorder %s252, 3
        %s254 = scalar_select %p253, %s252, 3
        %s255 = smul.addr %s254, 8
        %s256 = scalar_lea.vmem %s2, %s255
        %s257 = smul.u32 2, %s18
        %s258 = smul.u32 2, %s18
        %p259 = scmp.lt.s32.totalorder %s258, 3
        %s260 = scalar_select %p259, %s258, 3
        %s261 = smul.addr %s260, 8
        %s262 = scalar_lea.vmem %s3, %s261
        %s263 = smul.u32 2, %s18
        %s264 = smul.u32 2, %s18
        %v265 = vld [vmem:[%s244] sm:$0xff]
        %v266 = vld [vmem:[%s244 + $0x8] sm:$0xff]
        %v267 = vld [vmem:[%s250] sm:$0xff]
        %v268 = vld [vmem:[%s250 + $0x8] sm:$0xff]
        %v269 = vld [vmem:[%s256] sm:$0xff]
        %v270 = vld [vmem:[%s256 + $0x8] sm:$0xff]
        %v271 = vld [vmem:[%s262] sm:$0xff]
        %v272 = vld [vmem:[%s262 + $0x8] sm:$0xff]
        %275 = vrot.lane.b32.xlu0 %v267, 32
        %v276 = vpop.permute.xlu0 %275
        %277 = vrot.lane.b32.xlu0 %v268, 32
        %v278 = vpop.permute.xlu0 %277
        %283 = vrot.lane.b32.xlu0 %v269, 48
        %v284 = vpop.permute.xlu0 %283
        %285 = vrot.lane.b32.xlu0 %v270, 48
        %v286 = vpop.permute.xlu0 %285
        %291 = vrot.lane.b32.xlu0 %v271, 64
        %v292 = vpop.permute.xlu0 %291
        %293 = vrot.lane.b32.xlu0 %v272, 64
        %v294 = vpop.permute.xlu0 %293
        %vm297 = vcmask 261120
        %v298 = vsel %vm297, %v265, %v276
        %v299 = vsel %vm297, %v266, %v278
        %vm300 = vcmask 392192
        %v301 = vsel %vm300, %v298, %v284
        %v302 = vsel %vm300, %v299, %v286
        %vm303 = vcmask 523264
        %v304 = vsel %vm303, %v301, %v292
        %v305 = vsel %vm303, %v302, %v294
        %vm306 = vcmask 588800
        %307 = vst.msk [vmem:[%s239] sm:$0xff] %vm306, %v304
        %308 = vst.msk [vmem:[%s239 + $0x8] sm:$0xff] %vm306, %v305
        %s309 = sand.u32 %s130, 1
        %s310 = scalar_lea.sflag [#allocation3], %s309
        %s311 = sand.u32 %s130, 1
        %s312 = smul.addr %s311, 16
        %s313 = scalar_lea.vmem [#allocation2], %s312
        // Predicated region
        $region37: #{tpu_custom_call.1} parent=35 // pred_check
          %p314 = pneg %p140
        $region38: #{tpu_custom_call.1} parent=35 // pred_check_branch
          %316 = sbr.rel (%p314) target = $region40
        $region39: #{tpu_custom_call.1} parent=35 // pred_region
          %s317 = smul.u32 2, %s18
          %s319 = ssub.s32 256, 256
          %320 = vsyncadd %s310, %s319
          %s321 = smul.addr %s317, 128
          %s322 = scalar_lea.hbm %s4, %s321
          %s323 = sshll.u32 %s313, 4
          %s324 = int_to_ptr.vmem [resolvable:$true] %s323
          %329 = dma.vmem_to_hbm [thread:$0]  %s324, 256, %s322, %s310, 128, 128, 8
        $region40: #{tpu_custom_call.1} parent=35 // pred_fallthru
          _
      $region36: #{tpu_custom_call.1} parent=5 // pred_fallthru
        _
      %p330 = scmp.le.s32.totalorder 2, %s13
      // Predicated region
      $region41: #{tpu_custom_call.1} parent=5 // pred_check
        %p331 = pneg %p330
      $region42: #{tpu_custom_call.1} parent=5 // pred_check_branch
        %333 = sbr.rel (%p331) target = $region44
      $region43: #{tpu_custom_call.1} parent=5 // pred_region
        %s334 = ssub.s32 %s13, 2
        // Predicated region
        $region45: #{tpu_custom_call.1} parent=43 // pred_check
          %p335 = pneg %p146
        $region46: #{tpu_custom_call.1} parent=43 // pred_check_branch
          %337 = sbr.rel (%p335) target = $region48
        $region47: #{tpu_custom_call.1} parent=43 // pred_region
          %s338 = sand.u32 %s131, 1
          %s339 = scalar_lea.sflag [#allocation3], %s338
          %s340 = sand.u32 %s131, 1
          %s341 = smul.addr %s340, 16
          %s342 = scalar_lea.vmem [#allocation2], %s341
          %343 = dma.done %s339, 256
        $region48: #{tpu_custom_call.1} parent=43 // pred_fallthru
          _
      $region44: #{tpu_custom_call.1} parent=5 // pred_fallthru
        _
    $region6: #{tpu_custom_call.1} parent=1 // loop_footer
      %s17 = sadd.s32 1, %s13
    $region7: #{tpu_custom_call.1} parent=1 // loop_footer_branch
      %12 = sbr.rel target = $region3
    $region8: #{tpu_custom_call.1} parent=1 // loop_exit
      _
    %344 = vsyncpa [#allocation3], 1
    %s345 = scalar_lea.sflag [#allocation3], 1
    %346 = vsyncpa %s345, 1

</llo_original>
